<compile_context>
chip_gen: v5e
topology: v5e:2x2
jax: 0.10.0
libtpu: 0.0.40
codegen_flags: <defaults>
</compile_context>

<pallas_src>
import functools
import math

import jax
import jax.numpy as jnp
from jax.experimental import pallas as pl
from jax.experimental.pallas import tpu as pltpu

LN_EPS = 1e-5               # XLM-Roberta layer_norm_eps
PAD_IDX = 1                 # XLM-Roberta padding_idx (positions start at PAD_IDX + 1)
IGNORE_INDEX = -100         # torch nn.CrossEntropyLoss default ignore_index
INV_SQRT2 = 0.7071067811865476
NEG_BIG = -1e30

_SUPPORTS_BUFFERED = None
_VMEM_LIMIT_CACHE = None


# ----------------------------------------------------------------------------
# capability / hardware helpers
# ----------------------------------------------------------------------------
def _buffered_weights_supported():
    """Probe once whether BlockSpec(pipeline_mode=pl.Buffered(1)) lowers + runs."""
    global _SUPPORTS_BUFFERED
    if _SUPPORTS_BUFFERED is not None:
        return _SUPPORTS_BUFFERED
    try:
        def _probe_kernel(x_ref, o_ref):
            o_ref[...] = x_ref[...] + 1.0

        f = pl.pallas_call(
            _probe_kernel,
            out_shape=jax.ShapeDtypeStruct((8, 128), jnp.float32),
            grid=(2,),
            in_specs=[pl.BlockSpec((8, 128), lambda i: (0, 0),
                                   pipeline_mode=pl.Buffered(1))],
            out_specs=pl.BlockSpec((8, 128), lambda i: (0, 0)),
        )
        res = jax.block_until_ready(f(jnp.zeros((8, 128), jnp.float32)))
        _SUPPORTS_BUFFERED = bool(jnp.all(res == 1.0))
    except Exception:
        _SUPPORTS_BUFFERED = False
    return _SUPPORTS_BUFFERED


def _resident_spec(block_shape, index_map):
    """BlockSpec for grid-invariant (resident) weights: single buffer if possible."""
    if _buffered_weights_supported():
        return pl.BlockSpec(block_shape, index_map, pipeline_mode=pl.Buffered(1))
    return pl.BlockSpec(block_shape, index_map)


def _vmem_limit():
    """Generation-aware scoped-VMEM limit (v7x has 64 MiB physical VMEM per TC)."""
    global _VMEM_LIMIT_CACHE
    if _VMEM_LIMIT_CACHE is None:
        cap = 128 * 1024 * 1024
        try:
            cap = int(pltpu.get_tpu_info().vmem_capacity_bytes)
        except Exception:
            pass
        if cap <= 64 * 1024 * 1024:
            _VMEM_LIMIT_CACHE = 42 * 1024 * 1024      # v7x: leave scratch headroom
        else:
            _VMEM_LIMIT_CACHE = 100 * 1024 * 1024     # v5e/v6e: 128 MiB physical
    return _VMEM_LIMIT_CACHE


def _choose_seq_tile(S):
    for t in (512, 256, 128, 64, 32, 16, 8):
        if S % t == 0:
            return t
    return S


def _layernorm(x, gamma, beta):
    # one-pass: var = E[x^2] - E[x]^2
    mu = jnp.mean(x, axis=-1, keepdims=True)
    ms = jnp.mean(x * x, axis=-1, keepdims=True)
    var = ms - mu * mu
    return (x - mu) * jax.lax.rsqrt(var + LN_EPS) * gamma + beta


# ----------------------------------------------------------------------------
# Kernel 1: embedding sum (word + position + token-type) + LayerNorm -> bf16
# grid = (B, S // tS); batch dim squeezed out of the blocks.
# ----------------------------------------------------------------------------
def embed_ln_kernel(word_ref, pos_ref, tok_ref, g_ref, b_ref, out_ref):
    e = word_ref[...].astype(jnp.float32) + pos_ref[...] + tok_ref[...]   # [tS, H]
    out_ref[...] = _layernorm(e, g_ref[...], b_ref[...]).astype(out_ref.dtype)


def embed_layernorm(word_e, pos_e, tok_e, gamma, beta):
    B, S, H = word_e.shape
    tS = _choose_seq_tile(S)
    return pl.pallas_call(
        embed_ln_kernel,
        out_shape=jax.ShapeDtypeStruct((B, S, H), jnp.bfloat16),
        grid=(B, S // tS),
        in_specs=[
            pl.BlockSpec((None, tS, H), lambda b, s: (b, s, 0)),
            pl.BlockSpec((tS, H), lambda b, s: (s, 0)),
            _resident_spec((1, H), lambda b, s: (0, 0)),
            _resident_spec((1, H), lambda b, s: (0, 0)),
            _resident_spec((1, H), lambda b, s: (0, 0)),
        ],
        out_specs=pl.BlockSpec((None, tS, H), lambda b, s: (b, s, 0)),
        compiler_params=pltpu.CompilerParams(
            dimension_semantics=("parallel", "parallel")),
    )(word_e, pos_e, tok_e, gamma, beta)


# ----------------------------------------------------------------------------
# Kernel 2: ONE fused encoder layer  (self-attention + residual/LN + FFN +
# residual/LN).  grid = (B,); the activation stays resident in VMEM between
# the attention and FFN halves (no HBM round trip per layer).
# ----------------------------------------------------------------------------
def layer_kernel(num_heads,
                 x_ref, mask_ref,
                 wqkv_ref, bqkv_ref, wo_ref, bo_ref, ln1g_ref, ln1b_ref,
                 w1_ref, b1_ref, w2_ref, b2_ref, ln2g_ref, ln2b_ref,
                 out_ref):
    x16 = x_ref[...]                                          # [S, H] bf16
    S, H = x16.shape
    nh = num_heads
    hd = H // nh
    x = x16.astype(jnp.float32)

    # --- self-attention (softmax scale pre-folded into Q weights/bias) ---
    qkv = jnp.dot(x16, wqkv_ref[...],
                  preferred_element_type=jnp.float32) + bqkv_ref[...]     # [S, 3H]
    qkv16 = qkv.astype(jnp.bfloat16)
    q = jnp.transpose(qkv16[:, 0 * H:1 * H].reshape(S, nh, hd), (1, 0, 2))  # [nh,S,hd]
    k = jnp.transpose(qkv16[:, 1 * H:2 * H].reshape(S, nh, hd), (1, 0, 2))
    v = jnp.transpose(qkv16[:, 2 * H:3 * H].reshape(S, nh, hd), (1, 0, 2))

    scores = jnp.einsum('nqd,nkd->nqk', q, k,
                        preferred_element_type=jnp.float32)               # [nh,S,S]
    scores = scores + mask_ref[...][None]          # additive mask, precomputed in JAX
    scores = scores - jnp.max(scores, axis=-1, keepdims=True)
    p = jnp.exp(scores)
    p = p * pl.reciprocal(jnp.sum(p, axis=-1, keepdims=True), approx=True)

    ctx = jnp.einsum('nqk,nkd->nqd', p.astype(jnp.bfloat16), v,
                     preferred_element_type=jnp.float32)                  # [nh,S,hd]
    ctx = jnp.transpose(ctx, (1, 0, 2)).reshape(S, H)                     # [S, H]
    attn = jnp.dot(ctx.astype(jnp.bfloat16), wo_ref[...],
                   preferred_element_type=jnp.float32) + bo_ref[...]
    y = _layernorm(x + attn, ln1g_ref[...], ln1b_ref[...])                # f32 [S, H]

    # --- feed-forward (exact GELU) ---
    y16 = y.astype(jnp.bfloat16)
    h1 = jnp.dot(y16, w1_ref[...],
                 preferred_element_type=jnp.float32) + b1_ref[...]        # [S, I]
    h1 = 0.5 * h1 * (1.0 + jax.lax.erf(h1 * INV_SQRT2))
    h2 = jnp.dot(h1.astype(jnp.bfloat16), w2_ref[...],
                 preferred_element_type=jnp.float32) + b2_ref[...]        # [S, H]
    out_ref[...] = _layernorm(y + h2, ln2g_ref[...], ln2b_ref[...]).astype(out_ref.dtype)


def encoder_layer(x, add_mask, layer, num_heads):
    B, S, H = x.shape
    I = layer["w1"].shape[1]
    return pl.pallas_call(
        functools.partial(layer_kernel, num_heads),
        out_shape=jax.ShapeDtypeStruct((B, S, H), jnp.bfloat16),
        grid=(B,),
        in_specs=[
            pl.BlockSpec((None, S, H), lambda b: (b, 0, 0)),     # x (bf16)
            pl.BlockSpec((1, S), lambda b: (b, 0)),              # additive mask
            _resident_spec((H, 3 * H), lambda b: (0, 0)),        # wqkv
            _resident_spec((1, 3 * H), lambda b: (0, 0)),        # bqkv
            _resident_spec((H, H), lambda b: (0, 0)),            # wo
            _resident_spec((1, H), lambda b: (0, 0)),            # bo
            _resident_spec((1, H), lambda b: (0, 0)),            # ln1_g
            _resident_spec((1, H), lambda b: (0, 0)),            # ln1_b
            _resident_spec((H, I), lambda b: (0, 0)),            # w1
            _resident_spec((1, I), lambda b: (0, 0)),            # b1
            _resident_spec((I, H), lambda b: (0, 0)),            # w2
            _resident_spec((1, H), lambda b: (0, 0)),            # b2
            _resident_spec((1, H), lambda b: (0, 0)),            # ln2_g
            _resident_spec((1, H), lambda b: (0, 0)),            # ln2_b
        ],
        out_specs=pl.BlockSpec((None, S, H), lambda b: (b, 0, 0)),
        compiler_params=pltpu.CompilerParams(
            dimension_semantics=("parallel",),
            vmem_limit_bytes=_vmem_limit()),
    )(x, add_mask, layer["wqkv"], layer["bqkv"], layer["wo"], layer["bo"],
      layer["ln1_g"], layer["ln1_b"], layer["w1"], layer["b1"],
      layer["w2"], layer["b2"], layer["ln2_g"], layer["ln2_b"])


# ----------------------------------------------------------------------------
# Kernel 3: classifier head (lane-padded to 128 labels) + per-position NLL +
# argmax tags.  Fully "parallel" grid over batch; the scalar loss reduction is
# done in plain JAX (honoring torch's ignore_index = -100).
# ----------------------------------------------------------------------------
def classifier_kernel(num_labels, x_ref, labels_ref, wc_ref, bc_ref,
                      nll_ref, tags_ref):
    x16 = x_ref[...]                                          # [S, H] bf16
    S = x16.shape[0]
    LP = wc_ref.shape[1]                                      # padded label width

    logits = jnp.dot(x16, wc_ref[...],
                     preferred_element_type=jnp.float32) + bc_ref[...]    # [S, LP]
    col = jax.lax.broadcasted_iota(jnp.int32, (S, LP), 1)
    logits = jnp.where(col < num_labels, logits, NEG_BIG)    # mask padded lanes

    mx = jnp.max(logits, axis=-1, keepdims=True)
    sh = logits - mx
    lse = jnp.log(jnp.sum(jnp.exp(sh), axis=-1, keepdims=True))
    logp = sh - lse                                           # log-softmax

    labels = labels_ref[0]                                    # [S] int32
    onehot = (col == labels[:, None]).astype(jnp.float32)     # 0 rows for ignore_index
    nll_ref[0] = jnp.sum(-logp * onehot, axis=-1)             # per-position NLL

    # argmax over labels (first maximal index, matching torch.max)
    is_max = logits == mx
    tags_ref[0] = jnp.min(jnp.where(is_max, col, LP), axis=-1).astype(jnp.int32)


def classifier_scores(x, labels, wc_pad, bc_pad, num_labels):
    B, S, H = x.shape
    LP = wc_pad.shape[1]
    nll, tags = pl.pallas_call(
        functools.partial(classifier_kernel, num_labels),
        out_shape=(jax.ShapeDtypeStruct((B, S), jnp.float32),
                   jax.ShapeDtypeStruct((B, S), jnp.int32)),
        grid=(B,),
        in_specs=[
            pl.BlockSpec((None, S, H), lambda b: (b, 0, 0)),
            pl.BlockSpec((1, S), lambda b: (b, 0)),
            _resident_spec((H, LP), lambda b: (0, 0)),
            _resident_spec((1, LP), lambda b: (0, 0)),
        ],
        out_specs=(pl.BlockSpec((1, S), lambda b: (b, 0)),
                   pl.BlockSpec((1, S), lambda b: (b, 0))),
        compiler_params=pltpu.CompilerParams(
            dimension_semantics=("parallel",)),
    )(x, labels, wc_pad, bc_pad)
    return nll, tags


# ----------------------------------------------------------------------------
# Full forward (use_ctx=False, use_crf=False)
# ----------------------------------------------------------------------------
def bert_chunk_tk_forward(params, input_ids, attention_mask, labels,
                          num_heads, num_labels):
    B, S = input_ids.shape
    # embedding gather is glue (data-dependent gather, done in plain JAX; bf16 table)
    word_e = jnp.take(params["word_emb"], input_ids, axis=0)          # [B, S, H] bf16
    # XLM-R with inputs_embeds uses sequential position ids starting at pad_idx+1
    pos_ids = jnp.arange(PAD_IDX + 1, S + PAD_IDX + 1)
    pos_e = jnp.take(params["pos_emb"], pos_ids, axis=0)              # [S, H] f32
    tok_e = params["tok_emb"][0:1]                                    # [1, H] (type 0)

    x = embed_layernorm(word_e, pos_e, tok_e,
                        params["emb_ln_g"], params["emb_ln_b"])       # [B,S,H] bf16

    # additive attention mask computed ONCE (hoisted out of all layer kernels)
    add_mask = (1.0 - attention_mask.astype(jnp.float32)) * (-1e9)    # [B, S]

    for layer in params["layers"]:
        x = encoder_layer(x, add_mask, layer, num_heads)

    cls_embed = x[:, 0:1, :].astype(jnp.float32)                      # outputs[0][:, 0:1, :]

    nll, tags = classifier_scores(x, labels,
                                  params["cls_w_pad"], params["cls_b_pad"],
                                  num_labels)
    # torch CrossEntropyLoss(): mean over positions with label != ignore_index
    valid = (labels != IGNORE_INDEX).astype(jnp.float32)
    loss = jnp.sum(nll) / jnp.maximum(jnp.sum(valid), 1.0)
    return loss, tags, cls_embed


# ----------------------------------------------------------------------------
# Deterministic synthetic parameters (bf16 matmul weights, f32 biases/LN).
# The 1/sqrt(head_dim) attention scale is folded into the Q part of wqkv/bqkv.
# ----------------------------------------------------------------------------
def init_params(key, vocab, max_pos, hidden, inter, num_labels, num_layers,
                num_heads):
    std = 0.02
    hd = hidden // num_heads
    q_scale = 1.0 / math.sqrt(hd)
    keys = iter(jax.random.split(key, 8 + 8 * num_layers))

    def nrm(shape):
        return std * jax.random.normal(next(keys), shape, dtype=jnp.float32)

    lp = ((num_labels + 127) // 128) * 128                 # lane-pad label dim to 128
    cls_w = nrm((hidden, num_labels))                      # classifier std = init_range
    cls_w_pad = jnp.zeros((hidden, lp), jnp.float32).at[:, :num_labels].set(cls_w)

    params = {
        "word_emb": nrm((vocab, hidden)).astype(jnp.bfloat16),
        "pos_emb": nrm((max_pos, hidden)),
        "tok_emb": nrm((2, hidden)),
        "emb_ln_g": jnp.ones((1, hidden), jnp.float32),
        "emb_ln_b": jnp.zeros((1, hidden), jnp.float32),
        "cls_w_pad": cls_w_pad.astype(jnp.bfloat16),
        "cls_b_pad": jnp.zeros((1, lp), jnp.float32),      # classifier bias zeroed
        "layers": [],
    }
    for _ in range(num_layers):
        wq = nrm((hidden, hidden)) * q_scale               # fold softmax scale into Q
        wk = nrm((hidden, hidden))
        wv = nrm((hidden, hidden))
        wqkv = jnp.concatenate([wq, wk, wv], axis=1)       # fused [H, 3H]
        params["layers"].append({
            "wqkv": wqkv.astype(jnp.bfloat16),
            "bqkv": jnp.zeros((1, 3 * hidden), jnp.float32),   # (Q bias scaled too: zero)
            "wo": nrm((hidden, hidden)).astype(jnp.bfloat16),
            "bo": jnp.zeros((1, hidden), jnp.float32),
            "ln1_g": jnp.ones((1, hidden), jnp.float32),
            "ln1_b": jnp.zeros((1, hidden), jnp.float32),
            "w1": nrm((hidden, inter)).astype(jnp.bfloat16),
            "b1": jnp.zeros((1, inter), jnp.float32),
            "w2": nrm((inter, hidden)).astype(jnp.bfloat16),
            "b2": jnp.zeros((1, hidden), jnp.float32),
            "ln2_g": jnp.ones((1, hidden), jnp.float32),
            "ln2_b": jnp.zeros((1, hidden), jnp.float32),
        })
    return params


if __name__ == "__main__":
    B, S = 2, 8
    VOCAB, MAX_POS = 50, 16
    HIDDEN, INTER = 32, 64
    NUM_HEADS, NUM_LAYERS, NUM_LABELS = 2, 2, 5

    root = jax.random.PRNGKey(0)
    k_params, k_ids, k_labels = jax.random.split(root, 3)

    params = init_params(k_params, VOCAB, MAX_POS, HIDDEN, INTER,
                         NUM_LABELS, NUM_LAYERS, NUM_HEADS)

    input_ids = jax.random.randint(k_ids, (B, S), 2, VOCAB, dtype=jnp.int32)
    attention_mask = jnp.concatenate(
        [jnp.ones((B, S - 2), jnp.int32), jnp.zeros((B, 2), jnp.int32)], axis=1)
    labels = jax.random.randint(k_labels, (B, S), 0, NUM_LABELS, dtype=jnp.int32)

    loss, tags, cls_embed = bert_chunk_tk_forward(
        params, input_ids, attention_mask, labels, NUM_HEADS, NUM_LABELS)
    jax.block_until_ready((loss, tags, cls_embed))

    assert cls_embed.shape == (B, 1, HIDDEN)
    assert tags.shape == (B, S)
    assert bool(jnp.all(tags < NUM_LABELS)) and bool(jnp.all(tags >= 0))
    assert bool(jnp.isfinite(loss))
    print("KERNEL_OK")
</pallas_src>

<mosaic_0001>
module attributes {stable_mosaic.version = 11 : i64} {
  func.func @_probe_kernel(%arg0: i32, %arg1: memref<8x128xf32, #tpu.memory_space<vmem>>, %arg2: memref<8x128xf32, #tpu.memory_space<vmem>>) attributes {dimension_semantics = [#tpu.dimension_semantics<arbitrary>], iteration_bounds = array<i64: 2>, scalar_prefetch = 0 : i64, scratch_operands = 0 : i64, tpu.core_type = #tpu.core_type<tc>, window_params = [{pipeline_mode = #tpu.pipeline_mode<synchronous>, transform_indices = @transform_0, window_bounds = array<i64: 8, 128>}, {pipeline_mode = #tpu.pipeline_mode<synchronous>, transform_indices = @transform_1, window_bounds = array<i64: 8, 128>}]} {
    %c0 = arith.constant 0 : index
    %c0_0 = arith.constant 0 : index
    %0 = vector.load %arg1[%c0, %c0_0] : memref<8x128xf32, #tpu.memory_space<vmem>>, vector<8x128xf32>
    %cst = arith.constant 1.000000e+00 : f32
    %1 = vector.broadcast %cst : f32 to vector<8x128xf32>
    %2 = arith.addf %0, %1 : vector<8x128xf32>
    %c0_1 = arith.constant 0 : index
    %c0_2 = arith.constant 0 : index
    %3 = vector.load %arg2[%c0_1, %c0_2] : memref<8x128xf32, #tpu.memory_space<vmem>>, vector<8x128xf32>
    tpu.vector_store %arg2[%c0_1, %c0_2], %2 {strides = array<i32>} : memref<8x128xf32, #tpu.memory_space<vmem>>, vector<8x128xf32>,
    return
  }
  func.func @transform_0(%arg0: i32) -> (i32, i32) {
    %c0_i32 = arith.constant 0 : i32
    %c0_i32_0 = arith.constant 0 : i32
    %c0_i32_1 = arith.constant 0 : i32
    return %c0_i32, %c0_i32_0 : i32, i32
  }
  func.func @transform_1(%arg0: i32) -> (i32, i32) {
    %c0_i32 = arith.constant 0 : i32
    %c0_i32_0 = arith.constant 0 : i32
    %c0_i32_1 = arith.constant 0 : i32
    return %c0_i32, %c0_i32_0 : i32, i32
  }
}

module attributes {stable_mosaic.version = 11 : i64} {
  func.func @embed_ln_kernel(%arg0: i32, %arg1: i32, %arg2: memref<1x8x32xbf16, #tpu.memory_space<vmem>>, %arg3: memref<8x32xf32, #tpu.memory_space<vmem>>, %arg4: memref<1x32xf32, #tpu.memory_space<vmem>>, %arg5: memref<1x32xf32, #tpu.memory_space<vmem>>, %arg6: memref<1x32xf32, #tpu.memory_space<vmem>>, %arg7: memref<1x8x32xbf16, #tpu.memory_space<vmem>>) attributes {dimension_semantics = [#tpu.dimension_semantics<parallel>, #tpu.dimension_semantics<parallel>], iteration_bounds = array<i64: 2, 1>, scalar_prefetch = 0 : i64, scratch_operands = 0 : i64, tpu.core_type = #tpu.core_type<tc>, window_params = [{transform_indices = @transform_0, window_bounds = array<i64: 1, 8, 32>}, {transform_indices = @transform_1, window_bounds = array<i64: 8, 32>}, {pipeline_mode = #tpu.pipeline_mode<synchronous>, transform_indices = @transform_2, window_bounds = array<i64: 1, 32>}, {pipeline_mode = #tpu.pipeline_mode<synchronous>, transform_indices = @transform_3, window_bounds = array<i64: 1, 32>}, {pipeline_mode = #tpu.pipeline_mode<synchronous>, transform_indices = @transform_4, window_bounds = array<i64: 1, 32>}, {transform_indices = @transform_5, window_bounds = array<i64: 1, 8, 32>}]} {
    %c0 = arith.constant 0 : index
    %c0_0 = arith.constant 0 : index
    %c0_1 = arith.constant 0 : index
    %0 = vector.load %arg2[%c0, %c0_0, %c0_1] : memref<1x8x32xbf16, #tpu.memory_space<vmem>>, vector<1x8x32xbf16>
    %1 = vector.shape_cast %0 : vector<1x8x32xbf16> to vector<8x32xbf16>
    %2 = arith.extf %1 : vector<8x32xbf16> to vector<8x32xf32>
    %c0_2 = arith.constant 0 : index
    %c0_3 = arith.constant 0 : index
    %3 = vector.load %arg3[%c0_2, %c0_3] : memref<8x32xf32, #tpu.memory_space<vmem>>, vector<8x32xf32>
    %4 = arith.addf %2, %3 : vector<8x32xf32>
    %c0_4 = arith.constant 0 : index
    %c0_5 = arith.constant 0 : index
    %5 = vector.load %arg4[%c0_4, %c0_5] : memref<1x32xf32, #tpu.memory_space<vmem>>, vector<1x32xf32>
    %6 = vector.broadcast %5 : vector<1x32xf32> to vector<8x32xf32>
    %7 = arith.addf %4, %6 : vector<8x32xf32>
    %c0_6 = arith.constant 0 : index
    %c0_7 = arith.constant 0 : index
    %8 = vector.load %arg5[%c0_6, %c0_7] : memref<1x32xf32, #tpu.memory_space<vmem>>, vector<1x32xf32>
    %c0_8 = arith.constant 0 : index
    %c0_9 = arith.constant 0 : index
    %9 = vector.load %arg6[%c0_8, %c0_9] : memref<1x32xf32, #tpu.memory_space<vmem>>, vector<1x32xf32>
    %cst = arith.constant dense<0.000000e+00> : vector<8xf32>
    %10 = vector.multi_reduction <add>, %7, %cst [1] : vector<8x32xf32> to vector<8xf32>
    %11 = vector.shape_cast %10 : vector<8xf32> to vector<8x1xf32>
    %cst_10 = arith.constant 3.200000e+01 : f32
    %12 = vector.broadcast %cst_10 : f32 to vector<8x1xf32>
    %13 = arith.divf %11, %12 : vector<8x1xf32>
    %14 = arith.mulf %7, %7 : vector<8x32xf32>
    %cst_11 = arith.constant dense<0.000000e+00> : vector<8xf32>
    %15 = vector.multi_reduction <add>, %14, %cst_11 [1] : vector<8x32xf32> to vector<8xf32>
    %16 = vector.shape_cast %15 : vector<8xf32> to vector<8x1xf32>
    %cst_12 = arith.constant 3.200000e+01 : f32
    %17 = vector.broadcast %cst_12 : f32 to vector<8x1xf32>
    %18 = arith.divf %16, %17 : vector<8x1xf32>
    %19 = arith.mulf %13, %13 : vector<8x1xf32>
    %20 = arith.subf %18, %19 : vector<8x1xf32>
    %21 = vector.broadcast %13 : vector<8x1xf32> to vector<8x32xf32>
    %22 = arith.subf %7, %21 : vector<8x32xf32>
    %cst_13 = arith.constant 9.99999974E-6 : f32
    %23 = vector.broadcast %cst_13 : f32 to vector<8x1xf32>
    %24 = arith.addf %20, %23 : vector<8x1xf32>
    %25 = math.rsqrt %24 : vector<8x1xf32>
    %26 = vector.broadcast %25 : vector<8x1xf32> to vector<8x32xf32>
    %27 = arith.mulf %22, %26 : vector<8x32xf32>
    %28 = vector.broadcast %8 : vector<1x32xf32> to vector<8x32xf32>
    %29 = arith.mulf %27, %28 : vector<8x32xf32>
    %30 = vector.broadcast %9 : vector<1x32xf32> to vector<8x32xf32>
    %31 = arith.addf %29, %30 : vector<8x32xf32>
    %32 = arith.truncf %31 : vector<8x32xf32> to vector<8x32xbf16>
    %c0_14 = arith.constant 0 : index
    %c0_15 = arith.constant 0 : index
    %c0_16 = arith.constant 0 : index
    %33 = vector.load %arg7[%c0_14, %c0_15, %c0_16] : memref<1x8x32xbf16, #tpu.memory_space<vmem>>, vector<1x8x32xbf16>
    %34 = vector.shape_cast %33 : vector<1x8x32xbf16> to vector<8x32xbf16>
    %35 = vector.shape_cast %32 : vector<8x32xbf16> to vector<1x8x32xbf16>
    tpu.vector_store %arg7[%c0_14, %c0_15, %c0_16], %35 {strides = array<i32>} : memref<1x8x32xbf16, #tpu.memory_space<vmem>>, vector<1x8x32xbf16>,
    return
  }
  func.func @transform_0(%arg0: i32, %arg1: i32) -> (i32, i32, i32) {
    %c0_i32 = arith.constant 0 : i32
    %c0_i32_0 = arith.constant 0 : i32
    return %arg0, %arg1, %c0_i32 : i32, i32, i32
  }
  func.func @transform_1(%arg0: i32, %arg1: i32) -> (i32, i32) {
    %c0_i32 = arith.constant 0 : i32
    %c0_i32_0 = arith.constant 0 : i32
    return %arg1, %c0_i32 : i32, i32
  }
  func.func @transform_2(%arg0: i32, %arg1: i32) -> (i32, i32) {
    %c0_i32 = arith.constant 0 : i32
    %c0_i32_0 = arith.constant 0 : i32
    %c0_i32_1 = arith.constant 0 : i32
    return %c0_i32, %c0_i32_0 : i32, i32
  }
  func.func @transform_3(%arg0: i32, %arg1: i32) -> (i32, i32) {
    %c0_i32 = arith.constant 0 : i32
    %c0_i32_0 = arith.constant 0 : i32
    %c0_i32_1 = arith.constant 0 : i32
    return %c0_i32, %c0_i32_0 : i32, i32
  }
  func.func @transform_4(%arg0: i32, %arg1: i32) -> (i32, i32) {
    %c0_i32 = arith.constant 0 : i32
    %c0_i32_0 = arith.constant 0 : i32
    %c0_i32_1 = arith.constant 0 : i32
    return %c0_i32, %c0_i32_0 : i32, i32
  }
  func.func @transform_5(%arg0: i32, %arg1: i32) -> (i32, i32, i32) {
    %c0_i32 = arith.constant 0 : i32
    %c0_i32_0 = arith.constant 0 : i32
    return %arg0, %arg1, %c0_i32 : i32, i32, i32
  }
}

</mosaic_0001>

<llo_original>
// kernel: tpu_custom_call.1
$region0: #{tpu_custom_call.1}
  #allocation0 [shape = 'u32[]', space=smem, size = 0x4, offset = 0x4, fixed_abs, tag = 'smem constant byte address 0x4 - core index']
  #allocation1 [shape = 'u32[72,128]{1,0:T(1,128)}', space=vmem, size = 0x9000, scoped, tag = 'internal scratch']
  %s0 = inlined_call_operand.hbm [shape: f32[8,128], index: 0, kind: input, shape index: {}]
  %s1 = inlined_call_operand.hbm [shape: f32[8,128], index: 1, kind: output, shape index: {}]
  %s2 = sld [smem:[#allocation0]]
  $region41: #{tpu_custom_call.1} parent=0
    _
  %s4 = ssub.s32 1, %s2
  %s5 = scalar_select 0, %s4, %s2
  $region1: #{tpu_custom_call.1} parent=0
    #allocation2 [shape = 'u8[4096]{0}', space=vmem, size = 0x1000, scoped, tag = 'input window, operand 0, single buffered']
    #allocation3 [shape = 's32[2]{0}', space=sflag, size = 0x8, scoped, tag = 'scoped memory for tpu_custom_call.1']
    #allocation4 [shape = 's32[2]{0}', space=sflag, size = 0x8, scoped, tag = 'scoped memory for tpu_custom_call.1']
    #allocation5 [shape = 'u8[4096]{0}', space=vmem, size = 0x1000, scoped, tag = 'output window, operand 0, single buffered']
    %6 = vsyncpa [#allocation3], 0
    %7 = vsyncpa [#allocation4], 0
    loop: start=0, step=1, limit=4
    $region2: #{tpu_custom_call.1} parent=1 // loop_pre_header
      _
    $region3: #{tpu_custom_call.1} parent=1 // loop_header
      %s9 = sphi 0, %s13
      %p10 = scmp.ge.s32.totalorder %s9, 4
      %s17 = sphi 0, %s17
      %s19 = sphi 0, %s17
      %s20 = sphi 0, %s19
      %s34 = sphi 0, %s20
      %s38 = sphi 0, %s38
      %s40 = sphi 0, %s38
      %s41 = sphi 0, %s40
      %s55 = sphi 0, %s41
    $region4: #{tpu_custom_call.1} parent=1 // loop_header_branch
      %12 = sbr.rel (%p10) target = $region8
    $region5: #{tpu_custom_call.1} parent=1 // loop_body
      %s14 = ssub.s32 %s9, 1
      %s15 = ssub.s32 %s9, 2
      %s16 = sadd.s32 %s9, 1
      %s18 = sadd.s32 %s17, 1
      %p21 = scmp.eq.s32.totalorder %s9, 1
      %p22 = scmp.ne.s32.totalorder %s17, %s19
      %p23 = scmp.eq.s32.totalorder %s9, 0
      %p24 = por %p22, %p23
      %p25 = scmp.ne.s32.totalorder %s17, %s19
      %p26 = scmp.eq.s32.totalorder %s14, 1
      %p27 = por %p25, %p26
      %p28 = scmp.ne.s32.totalorder %s19, %s20
      %p29 = scmp.eq.s32.totalorder %s14, 0
      %p30 = por %p28, %p29
      %p31 = scmp.ne.s32.totalorder %s19, %s20
      %p32 = scmp.eq.s32.totalorder %s15, 1
      %p33 = por %p31, %p32
      %p35 = scmp.ne.s32.totalorder %s20, %s34
      %p36 = scmp.eq.s32.totalorder %s15, 0
      %p37 = por %p35, %p36
      %s39 = sadd.s32 %s38, 1
      %p42 = scmp.eq.s32.totalorder %s9, 1
      %p43 = scmp.ne.s32.totalorder %s38, %s40
      %p44 = scmp.eq.s32.totalorder %s9, 0
      %p45 = por %p43, %p44
      %p46 = scmp.ne.s32.totalorder %s38, %s40
      %p47 = scmp.eq.s32.totalorder %s14, 1
      %p48 = por %p46, %p47
      %p49 = scmp.ne.s32.totalorder %s40, %s41
      %p50 = scmp.eq.s32.totalorder %s14, 0
      %p51 = por %p49, %p50
      %p52 = scmp.ne.s32.totalorder %s40, %s41
      %p53 = scmp.eq.s32.totalorder %s15, 1
      %p54 = por %p52, %p53
      %p56 = scmp.ne.s32.totalorder %s41, %s55
      %p57 = scmp.eq.s32.totalorder %s15, 0
      %p58 = por %p56, %p57
      %p59 = scmp.le.s32.totalorder 1, %s9
      %p60 = scmp.lt.s32.totalorder %s9, 3
      %p61 = pnand %p59, %p60
      %p62 = pneg %p61
      // Predicated region
      $region9: #{tpu_custom_call.1} parent=5 // pred_check
        _
      $region10: #{tpu_custom_call.1} parent=5 // pred_check_branch
        %64 = sbr.rel (%p61) target = $region12
      $region11: #{tpu_custom_call.1} parent=5 // pred_region
        %s65 = ssub.s32 %s9, 1
        // Predicated region
        $region13: #{tpu_custom_call.1} parent=11 // pred_check
          %p66 = pneg %p30
        $region14: #{tpu_custom_call.1} parent=11 // pred_check_branch
          %68 = sbr.rel (%p66) target = $region16
        $region15: #{tpu_custom_call.1} parent=11 // pred_region
          %70 = vsyncadd [#allocation3], 0
          %s72 = sshll.u32 %s0, 4
          %s73 = int_to_ptr.hbm [resolvable:$true] %s72
          %s74 = sshll.u32 [#allocation2], 4
          %s75 = int_to_ptr.vmem [resolvable:$true] %s74
          %77 = dma.hbm_to_vmem [thread:$0]  %s73, 128, %s75, [#allocation3]
        $region16: #{tpu_custom_call.1} parent=11 // pred_fallthru
          _
      $region12: #{tpu_custom_call.1} parent=5 // pred_fallthru
        _
      %p78 = scmp.lt.s32.totalorder %s9, 2
      // Predicated region
      $region17: #{tpu_custom_call.1} parent=5 // pred_check
        %p79 = pneg %p78
      $region18: #{tpu_custom_call.1} parent=5 // pred_check_branch
        %81 = sbr.rel (%p79) target = $region20
      $region19: #{tpu_custom_call.1} parent=5 // pred_region
        _
      $region20: #{tpu_custom_call.1} parent=5 // pred_fallthru
        _
      %p82 = scmp.le.s32.totalorder 1, %s9
      %p83 = scmp.lt.s32.totalorder %s9, 3
      %p84 = pnand %p82, %p83
      %p85 = pneg %p84
      // Predicated region
      $region21: #{tpu_custom_call.1} parent=5 // pred_check
        _
      $region22: #{tpu_custom_call.1} parent=5 // pred_check_branch
        %87 = sbr.rel (%p84) target = $region24
      $region23: #{tpu_custom_call.1} parent=5 // pred_region
        %s88 = ssub.s32 %s9, 1
        // Predicated region
        $region25: #{tpu_custom_call.1} parent=23 // pred_check
          %p89 = pneg %p30
        $region26: #{tpu_custom_call.1} parent=23 // pred_check_branch
          %91 = sbr.rel (%p89) target = $region28
        $region27: #{tpu_custom_call.1} parent=23 // pred_region
          %93 = dma.done [#allocation3], 128
        $region28: #{tpu_custom_call.1} parent=23 // pred_fallthru
          _
        %p94 = pneg %p30
        %p95 = pneg %p27
        %p96 = pneg %p51
        %p97 = pneg %p48
        %v98 = vld [vmem:[#allocation2] sm:$0xff]
        %v99 = vadd.f32 %v98, 1.0
        %100 = vst [vmem:[#allocation5] sm:$0xff] %v99
        // Predicated region
        $region29: #{tpu_custom_call.1} parent=23 // pred_check
          %p101 = pneg %p48
        $region30: #{tpu_custom_call.1} parent=23 // pred_check_branch
          %103 = sbr.rel (%p101) target = $region32
        $region31: #{tpu_custom_call.1} parent=23 // pred_region
          %105 = vsyncadd [#allocation4], 0
          %s107 = sshll.u32 [#allocation5], 4
          %s108 = int_to_ptr.vmem [resolvable:$true] %s107
          %s109 = sshll.u32 %s1, 4
          %s110 = int_to_ptr.hbm [resolvable:$true] %s109
          %112 = dma.vmem_to_hbm [thread:$0]  %s108, 128, %s110, [#allocation4]
        $region32: #{tpu_custom_call.1} parent=23 // pred_fallthru
          _
        // Predicated region
        $region33: #{tpu_custom_call.1} parent=23 // pred_check
          %p113 = pneg %p48
        $region34: #{tpu_custom_call.1} parent=23 // pred_check_branch
          %115 = sbr.rel (%p113) target = $region36
        $region35: #{tpu_custom_call.1} parent=23 // pred_region
          %117 = dma.done [#allocation4], 128
        $region36: #{tpu_custom_call.1} parent=23 // pred_fallthru
          _
      $region24: #{tpu_custom_call.1} parent=5 // pred_fallthru
        _
      %p118 = scmp.le.s32.totalorder 2, %s9
      // Predicated region
      $region37: #{tpu_custom_call.1} parent=5 // pred_check
        %p119 = pneg %p118
      $region38: #{tpu_custom_call.1} parent=5 // pred_check_branch
        %121 = sbr.rel (%p119) target = $region40
      $region39: #{tpu_custom_call.1} parent=5 // pred_region
        %s122 = ssub.s32 %s9, 2
      $region40: #{tpu_custom_call.1} parent=5 // pred_fallthru
        _
    $region6: #{tpu_custom_call.1} parent=1 // loop_footer
      %s13 = sadd.s32 1, %s9
    $region7: #{tpu_custom_call.1} parent=1 // loop_footer_branch
      %8 = sbr.rel target = $region3
    $region8: #{tpu_custom_call.1} parent=1 // loop_exit
      _
    %123 = vsyncpa [#allocation3], 1
    %s124 = scalar_lea.sflag [#allocation3], 1
    %125 = vsyncpa %s124, 1
    %126 = vsyncpa [#allocation4], 1
    %s127 = scalar_lea.sflag [#allocation4], 1
    %128 = vsyncpa %s127, 1

// kernel: tpu_custom_call.1
$region0: #{tpu_custom_call.1}
  #allocation0 [shape = 'u32[]', space=smem, size = 0x4, offset = 0x4, fixed_abs, tag = 'smem constant byte address 0x4 - core index']
  #allocation1 [shape = 'u32[72,128]{1,0:T(1,128)}', space=vmem, size = 0x9000, scoped, tag = 'internal scratch']
  %s0 = inlined_call_operand.hbm [shape: bf16[2,8,32], index: 0, kind: input, shape index: {}]
  %s1 = inlined_call_operand.hbm [shape: f32[8,32], index: 1, kind: input, shape index: {}]
  %s2 = inlined_call_operand.vmem [shape: f32[1,32], index: 2, kind: input, shape index: {}]
  %s3 = inlined_call_operand.vmem [shape: f32[1,32], index: 3, kind: input, shape index: {}]
  %s4 = inlined_call_operand.vmem [shape: f32[1,32], index: 4, kind: input, shape index: {}]
  %s5 = inlined_call_operand.hbm [shape: bf16[2,8,32], index: 5, kind: output, shape index: {}]
  %s6 = sld [smem:[#allocation0]]
  $region61: #{tpu_custom_call.1} parent=0
    _
  %s8 = ssub.s32 1, %s6
  %s9 = scalar_select 0, %s8, %s6
  $region1: #{tpu_custom_call.1} parent=0
    #allocation2 [shape = 'u8[4096]{0}', space=vmem, size = 0x1000, scoped, tag = 'input window, operand 0']
    #allocation3 [shape = 's32[2]{0}', space=sflag, size = 0x8, scoped, tag = 'scoped memory for tpu_custom_call.1']
    #allocation4 [shape = 's32[2]{0}', space=sflag, size = 0x8, scoped, tag = 'scoped memory for tpu_custom_call.1']
    #allocation5 [shape = 'u8[4096]{0}', space=vmem, size = 0x1000, scoped, tag = 'input window, operand 1, single buffered']
    #allocation6 [shape = 's32[1]{0}', space=sflag, size = 0x4, scoped, tag = 'scoped memory for tpu_custom_call.1']
    #allocation7 [shape = 'u8[4096]{0}', space=vmem, size = 0x1000, scoped, tag = 'output window, operand 0']
    %10 = vsyncpa [#allocation3], 0
    %s11 = scalar_lea.sflag [#allocation3], 1
    %12 = vsyncpa %s11, 0
    %13 = vsyncpa [#allocation6], 0
    %14 = vsyncpa [#allocation4], 0
    %s15 = scalar_lea.sflag [#allocation4], 1
    %16 = vsyncpa %s15, 0
    loop: start=0, step=1, limit=4
    $region2: #{tpu_custom_call.1} parent=1 // loop_pre_header
      _
    $region3: #{tpu_custom_call.1} parent=1 // loop_header
      %s18 = sphi 0, %s22
      %p19 = scmp.ge.s32.totalorder %s18, 4
      %s25 = sphi 0, %s37
      %s26 = sphi 0, %s33
      %s27 = sphi 0, %s25
      %s28 = sphi 0, %s26
      %s29 = sphi 0, %s27
      %s30 = sphi 0, %s28
      %s42 = sphi 0, %s44
      %s45 = sphi 0, %s42
      %s46 = sphi 0, %s45
      %s62 = sphi 0, %s46
      %s68 = sphi 0, %s70
      %s71 = sphi 0, %s68
      %s72 = sphi 0, %s71
      %s88 = sphi 0, %s72
      %s92 = sphi 0, %s92
      %s94 = sphi 0, %s92
      %s95 = sphi 0, %s94
      %s109 = sphi 0, %s95
      %s113 = sphi 0, %s113
      %s115 = sphi 0, %s113
      %s116 = sphi 0, %s115
      %s130 = sphi 0, %s116
      %s134 = sphi 0, %s134
      %s136 = sphi 0, %s134
      %s137 = sphi 0, %s136
      %s151 = sphi 0, %s137
      %s159 = sphi 0, %s161
      %s162 = sphi 0, %s159
      %s163 = sphi 0, %s162
      %s179 = sphi 0, %s163
    $region4: #{tpu_custom_call.1} parent=1 // loop_header_branch
      %21 = sbr.rel (%p19) target = $region8
    $region5: #{tpu_custom_call.1} parent=1 // loop_body
      %s23 = ssub.s32 %s18, 1
      %s24 = ssub.s32 %s18, 2
      %s31 = sadd.s32 1, %s26
      %p32 = scmp.ge.s32.totalorder %s31, 1
      %s33 = scalar_select %p32, 0, %s31
      %s34 = sadd.s32 1, %s25
      %s35 = scalar_select %p32, %s34, %s25
      %p36 = scmp.ge.s32.totalorder %s35, 2
      %s37 = scalar_select %p36, 0, %s35
      %s38 = ssub.s32 %s25, %s37
      %s39 = ssub.s32 %s26, %s33
      %s40 = sor.u32 %s38, %s39
      %p41 = scmp.eq.s32.totalorder %s40, 0
      %s43 = sadd.s32 %s42, 1
      %s44 = scalar_select %p41, %s42, %s43
      %p47 = pneg %p41
      %p48 = scmp.eq.s32.totalorder %s18, 1
      %p49 = por %p47, %p48
      %p50 = scmp.ne.s32.totalorder %s42, %s45
      %p51 = scmp.eq.s32.totalorder %s18, 0
      %p52 = por %p50, %p51
      %p53 = scmp.ne.s32.totalorder %s42, %s45
      %p54 = scmp.eq.s32.totalorder %s23, 1
      %p55 = por %p53, %p54
      %p56 = scmp.ne.s32.totalorder %s45, %s46
      %p57 = scmp.eq.s32.totalorder %s23, 0
      %p58 = por %p56, %p57
      %p59 = scmp.ne.s32.totalorder %s45, %s46
      %p60 = scmp.eq.s32.totalorder %s24, 1
      %p61 = por %p59, %p60
      %p63 = scmp.ne.s32.totalorder %s46, %s62
      %p64 = scmp.eq.s32.totalorder %s24, 0
      %p65 = por %p63, %p64
      %s66 = ssub.s32 %s26, %s33
      %p67 = scmp.eq.s32.totalorder %s66, 0
      %s69 = sadd.s32 %s68, 1
      %s70 = scalar_select %p67, %s68, %s69
      %p73 = pneg %p67
      %p74 = scmp.eq.s32.totalorder %s18, 1
      %p75 = por %p73, %p74
      %p76 = scmp.ne.s32.totalorder %s68, %s71
      %p77 = scmp.eq.s32.totalorder %s18, 0
      %p78 = por %p76, %p77
      %p79 = scmp.ne.s32.totalorder %s68, %s71
      %p80 = scmp.eq.s32.totalorder %s23, 1
      %p81 = por %p79, %p80
      %p82 = scmp.ne.s32.totalorder %s71, %s72
      %p83 = scmp.eq.s32.totalorder %s23, 0
      %p84 = por %p82, %p83
      %p85 = scmp.ne.s32.totalorder %s71, %s72
      %p86 = scmp.eq.s32.totalorder %s24, 1
      %p87 = por %p85, %p86
      %p89 = scmp.ne.s32.totalorder %s72, %s88
      %p90 = scmp.eq.s32.totalorder %s24, 0
      %p91 = por %p89, %p90
      %s93 = sadd.s32 %s92, 1
      %p96 = scmp.eq.s32.totalorder %s18, 1
      %p97 = scmp.ne.s32.totalorder %s92, %s94
      %p98 = scmp.eq.s32.totalorder %s18, 0
      %p99 = por %p97, %p98
      %p100 = scmp.ne.s32.totalorder %s92, %s94
      %p101 = scmp.eq.s32.totalorder %s23, 1
      %p102 = por %p100, %p101
      %p103 = scmp.ne.s32.totalorder %s94, %s95
      %p104 = scmp.eq.s32.totalorder %s23, 0
      %p105 = por %p103, %p104
      %p106 = scmp.ne.s32.totalorder %s94, %s95
      %p107 = scmp.eq.s32.totalorder %s24, 1
      %p108 = por %p106, %p107
      %p110 = scmp.ne.s32.totalorder %s95, %s109
      %p111 = scmp.eq.s32.totalorder %s24, 0
      %p112 = por %p110, %p111
      %s114 = sadd.s32 %s113, 1
      %p117 = scmp.eq.s32.totalorder %s18, 1
      %p118 = scmp.ne.s32.totalorder %s113, %s115
      %p119 = scmp.eq.s32.totalorder %s18, 0
      %p120 = por %p118, %p119
      %p121 = scmp.ne.s32.totalorder %s113, %s115
      %p122 = scmp.eq.s32.totalorder %s23, 1
      %p123 = por %p121, %p122
      %p124 = scmp.ne.s32.totalorder %s115, %s116
      %p125 = scmp.eq.s32.totalorder %s23, 0
      %p126 = por %p124, %p125
      %p127 = scmp.ne.s32.totalorder %s115, %s116
      %p128 = scmp.eq.s32.totalorder %s24, 1
      %p129 = por %p127, %p128
      %p131 = scmp.ne.s32.totalorder %s116, %s130
      %p132 = scmp.eq.s32.totalorder %s24, 0
      %p133 = por %p131, %p132
      %s135 = sadd.s32 %s134, 1
      %p138 = scmp.eq.s32.totalorder %s18, 1
      %p139 = scmp.ne.s32.totalorder %s134, %s136
      %p140 = scmp.eq.s32.totalorder %s18, 0
      %p141 = por %p139, %p140
      %p142 = scmp.ne.s32.totalorder %s134, %s136
      %p143 = scmp.eq.s32.totalorder %s23, 1
      %p144 = por %p142, %p143
      %p145 = scmp.ne.s32.totalorder %s136, %s137
      %p146 = scmp.eq.s32.totalorder %s23, 0
      %p147 = por %p145, %p146
      %p148 = scmp.ne.s32.totalorder %s136, %s137
      %p149 = scmp.eq.s32.totalorder %s24, 1
      %p150 = por %p148, %p149
      %p152 = scmp.ne.s32.totalorder %s137, %s151
      %p153 = scmp.eq.s32.totalorder %s24, 0
      %p154 = por %p152, %p153
      %s155 = ssub.s32 %s25, %s37
      %s156 = ssub.s32 %s26, %s33
      %s157 = sor.u32 %s155, %s156
      %p158 = scmp.eq.s32.totalorder %s157, 0
      %s160 = sadd.s32 %s159, 1
      %s161 = scalar_select %p158, %s159, %s160
      %p164 = pneg %p158
      %p165 = scmp.eq.s32.totalorder %s18, 1
      %p166 = por %p164, %p165
      %p167 = scmp.ne.s32.totalorder %s159, %s162
      %p168 = scmp.eq.s32.totalorder %s18, 0
      %p169 = por %p167, %p168
      %p170 = scmp.ne.s32.totalorder %s159, %s162
      %p171 = scmp.eq.s32.totalorder %s23, 1
      %p172 = por %p170, %p171
      %p173 = scmp.ne.s32.totalorder %s162, %s163
      %p174 = scmp.eq.s32.totalorder %s23, 0
      %p175 = por %p173, %p174
      %p176 = scmp.ne.s32.totalorder %s162, %s163
      %p177 = scmp.eq.s32.totalorder %s24, 1
      %p178 = por %p176, %p177
      %p180 = scmp.ne.s32.totalorder %s163, %s179
      %p181 = scmp.eq.s32.totalorder %s24, 0
      %p182 = por %p180, %p181
      %p183 = scmp.le.s32.totalorder 1, %s18
      %p184 = scmp.lt.s32.totalorder %s18, 3
      %p185 = pnand %p183, %p184
      %p186 = pneg %p185
      // Predicated region
      $region9: #{tpu_custom_call.1} parent=5 // pred_check
        _
      $region10: #{tpu_custom_call.1} parent=5 // pred_check_branch
        %188 = sbr.rel (%p185) target = $region12
      $region11: #{tpu_custom_call.1} parent=5 // pred_region
        %s189 = ssub.s32 %s18, 1
        // Predicated region
        $region13: #{tpu_custom_call.1} parent=11 // pred_check
          %p190 = pneg %p84
        $region14: #{tpu_custom_call.1} parent=11 // pred_check_branch
          %192 = sbr.rel (%p190) target = $region16
        $region15: #{tpu_custom_call.1} parent=11 // pred_region
          %194 = vsyncadd [#allocation6], 0
          %s195 = smul.addr %s28, 8
          %s196 = scalar_lea.hbm %s1, %s195
          %s198 = sshll.u32 %s196, 4
          %s199 = int_to_ptr.hbm [resolvable:$true] %s198
          %s200 = sshll.u32 [#allocation5], 4
          %s201 = int_to_ptr.vmem [resolvable:$true] %s200
          %203 = dma.hbm_to_vmem [thread:$0]  %s199, 128, %s201, [#allocation6]
        $region16: #{tpu_custom_call.1} parent=11 // pred_fallthru
          _
        // Predicated region
        $region17: #{tpu_custom_call.1} parent=11 // pred_check
          %p204 = pneg %p105
        $region18: #{tpu_custom_call.1} parent=11 // pred_check_branch
          %206 = sbr.rel (%p204) target = $region20
        $region19: #{tpu_custom_call.1} parent=11 // pred_region
          _
        $region20: #{tpu_custom_call.1} parent=11 // pred_fallthru
          _
        // Predicated region
        $region21: #{tpu_custom_call.1} parent=11 // pred_check
          %p207 = pneg %p126
        $region22: #{tpu_custom_call.1} parent=11 // pred_check_branch
          %209 = sbr.rel (%p207) target = $region24
        $region23: #{tpu_custom_call.1} parent=11 // pred_region
          _
        $region24: #{tpu_custom_call.1} parent=11 // pred_fallthru
          _
        // Predicated region
        $region25: #{tpu_custom_call.1} parent=11 // pred_check
          %p210 = pneg %p147
        $region26: #{tpu_custom_call.1} parent=11 // pred_check_branch
          %212 = sbr.rel (%p210) target = $region28
        $region27: #{tpu_custom_call.1} parent=11 // pred_region
          _
        $region28: #{tpu_custom_call.1} parent=11 // pred_fallthru
          _
      $region12: #{tpu_custom_call.1} parent=5 // pred_fallthru
        _
      %p213 = scmp.lt.s32.totalorder %s18, 2
      // Predicated region
      $region29: #{tpu_custom_call.1} parent=5 // pred_check
        %p214 = pneg %p213
      $region30: #{tpu_custom_call.1} parent=5 // pred_check_branch
        %216 = sbr.rel (%p214) target = $region32
      $region31: #{tpu_custom_call.1} parent=5 // pred_region
        // Predicated region
        $region33: #{tpu_custom_call.1} parent=31 // pred_check
          %p217 = pneg %p52
        $region34: #{tpu_custom_call.1} parent=31 // pred_check_branch
          %219 = sbr.rel (%p217) target = $region36
        $region35: #{tpu_custom_call.1} parent=31 // pred_region
          %s220 = sand.u32 %s42, 1
          %s221 = scalar_lea.sflag [#allocation3], %s220
          %s222 = sand.u32 %s42, 1
          %s223 = smul.addr %s222, 4
          %s224 = scalar_lea.vmem [#allocation2], %s223
          %226 = vsyncadd %s221, 0
          %s227 = sadd.s32 %s26, %s25
          %s228 = smul.addr %s227, 4
          %s229 = scalar_lea.hbm %s0, %s228
          %s231 = sshll.u32 %s229, 4
          %s232 = int_to_ptr.hbm [resolvable:$true] %s231
          %s233 = sshll.u32 %s224, 4
          %s234 = int_to_ptr.vmem [resolvable:$true] %s233
          %236 = dma.hbm_to_vmem [thread:$0]  %s232, 64, %s234, %s221
        $region36: #{tpu_custom_call.1} parent=31 // pred_fallthru
          _
      $region32: #{tpu_custom_call.1} parent=5 // pred_fallthru
        _
      %p237 = scmp.le.s32.totalorder 1, %s18
      %p238 = scmp.lt.s32.totalorder %s18, 3
      %p239 = pnand %p237, %p238
      %p240 = pneg %p239
      // Predicated region
      $region37: #{tpu_custom_call.1} parent=5 // pred_check
        _
      $region38: #{tpu_custom_call.1} parent=5 // pred_check_branch
        %242 = sbr.rel (%p239) target = $region40
      $region39: #{tpu_custom_call.1} parent=5 // pred_region
        %s243 = ssub.s32 %s18, 1
        %s244 = sand.u32 %s45, 1
        %s245 = scalar_lea.sflag [#allocation3], %s244
        %s246 = sand.u32 %s45, 1
        %s247 = smul.addr %s246, 4
        %s248 = scalar_lea.vmem [#allocation2], %s247
        // Predicated region
        $region41: #{tpu_custom_call.1} parent=39 // pred_check
          %p249 = pneg %p58
        $region42: #{tpu_custom_call.1} parent=39 // pred_check_branch
          %251 = sbr.rel (%p249) target = $region44
        $region43: #{tpu_custom_call.1} parent=39 // pred_region
          %253 = dma.done %s245, 64
        $region44: #{tpu_custom_call.1} parent=39 // pred_fallthru
          _
        // Predicated region
        $region45: #{tpu_custom_call.1} parent=39 // pred_check
          %p254 = pneg %p84
        $region46: #{tpu_custom_call.1} parent=39 // pred_check_branch
          %256 = sbr.rel (%p254) target = $region48
        $region47: #{tpu_custom_call.1} parent=39 // pred_region
          %258 = dma.done [#allocation6], 128
        $region48: #{tpu_custom_call.1} parent=39 // pred_fallthru
          _
        %s259 = sand.u32 %s45, 1
        %s260 = scalar_lea.sflag [#allocation3], %s259
        %s261 = sand.u32 %s45, 1
        %s262 = smul.addr %s261, 4
        %s263 = scalar_lea.vmem [#allocation2], %s262
        %p264 = pneg %p58
        %p265 = pneg %p55
        %p266 = pneg %p84
        %p267 = pneg %p81
        %p268 = pneg %p105
        %p269 = pneg %p102
        %p270 = pneg %p126
        %p271 = pneg %p123
        %p272 = pneg %p147
        %p273 = pneg %p144
        %p274 = pneg %p175
        %p275 = pneg %p172
        %s276 = sand.u32 %s162, 1
        %s277 = scalar_lea.sflag [#allocation4], %s276
        %s278 = sand.u32 %s162, 1
        %s279 = smul.addr %s278, 4
        %s280 = scalar_lea.vmem [#allocation7], %s279
        %v281 = vld [vmem:[%s248] sm:$0xf]
        %v282 = vunpack.c.l.bf16 %v281
        %v283 = vld [vmem:[#allocation5] sm:$0xff]
        %v284 = vadd.f32 %v282, %v283
        %v285 = vld [vmem:[%s2] sm:$0x1]
        %v287 = vperm.slane %v285, 0
        %v289 = vadd.f32 %v284, %v287
        %v290 = vld [vmem:[%s3] sm:$0x1]
        %v291 = vld [vmem:[%s4] sm:$0x1]
        %vm292 = vcmask 261120
        %v293 = vsel %vm292, %v289, 0.0
        %294 = vadd.xlane.f32.xlu0 %v293
        %v295 = vpop.xlane.xlu0 %294
        %v296 = vrcp.pop 32.0
        %v297 = vmul.f32 32.0, %v296
        %v298 = vsub.f32 1.0, %v297
        %v299 = vmul.f32 %v296, %v298
        %v300 = vadd.f32 %v296, %v299
        %vm301 = vweird.f32 %v296
        %v302 = vsel %vm301, %v296, %v300
        %v303 = vmul.f32 %v295, %v302
        %v304 = vmul.f32 %v289, %v289
        %v305 = vsel %vm292, %v304, 0.0
        %306 = vadd.xlane.f32.xlu0 %v305
        %v307 = vpop.xlane.xlu0 %306
        %v308 = vmul.f32 %v307, %v302
        %v309 = vmul.f32 %v303, %v303
        %v310 = vsub.f32 %v308, %v309
        %v311 = vsub.f32 %v289, %v303
        %v312 = vadd.f32 %v310, 1e-05
        %v313 = vrsqrt.pop %v312
        %v314 = vmul.f32 %v313, %v312
        %v315 = vmul.f32 %v314, %v313
        %v316 = vmul.f32 0.5, %v315
        %v317 = vsub.f32 1.5, %v316
        %v318 = vmul.f32 %v313, %v317
        %vm319 = vweird.f32 %v312
        %vm320 = vweird.f32 %v313
        %vm321 = vmor %vm319, %vm320
        %v322 = vsel %vm321, %v313, %v318
        %v323 = vmul.f32 %v311, %v322
        %v325 = vperm.slane %v290, 0
        %v327 = vmul.f32 %v323, %v325
        %v329 = vperm.slane %v291, 0
        %v331 = vadd.f32 %v327, %v329
        %v332 = vpack.c.bf16 %v331, %v331
        %vm333 = vcmask 257024
        %334 = vst.msk [vmem:[%s280] sm:$0xf] %vm333, %v332
        %s335 = sand.u32 %s162, 1
        %s336 = scalar_lea.sflag [#allocation4], %s335
        %s337 = sand.u32 %s162, 1
        %s338 = smul.addr %s337, 4
        %s339 = scalar_lea.vmem [#allocation7], %s338
        // Predicated region
        $region49: #{tpu_custom_call.1} parent=39 // pred_check
          %p340 = pneg %p172
        $region50: #{tpu_custom_call.1} parent=39 // pred_check_branch
          %342 = sbr.rel (%p340) target = $region52
        $region51: #{tpu_custom_call.1} parent=39 // pred_region
          %344 = vsyncadd %s336, 0
          %s345 = sadd.s32 %s28, %s27
          %s346 = smul.addr %s345, 4
          %s347 = scalar_lea.hbm %s5, %s346
          %s349 = sshll.u32 %s339, 4
          %s350 = int_to_ptr.vmem [resolvable:$true] %s349
          %s351 = sshll.u32 %s347, 4
          %s352 = int_to_ptr.hbm [resolvable:$true] %s351
          %354 = dma.vmem_to_hbm [thread:$0]  %s350, 64, %s352, %s336
        $region52: #{tpu_custom_call.1} parent=39 // pred_fallthru
          _
      $region40: #{tpu_custom_call.1} parent=5 // pred_fallthru
        _
      %p355 = scmp.le.s32.totalorder 2, %s18
      // Predicated region
      $region53: #{tpu_custom_call.1} parent=5 // pred_check
        %p356 = pneg %p355
      $region54: #{tpu_custom_call.1} parent=5 // pred_check_branch
        %358 = sbr.rel (%p356) target = $region56
      $region55: #{tpu_custom_call.1} parent=5 // pred_region
        %s359 = ssub.s32 %s18, 2
        // Predicated region
        $region57: #{tpu_custom_call.1} parent=55 // pred_check
          %p360 = pneg %p178
        $region58: #{tpu_custom_call.1} parent=55 // pred_check_branch
          %362 = sbr.rel (%p360) target = $region60
        $region59: #{tpu_custom_call.1} parent=55 // pred_region
          %s363 = sand.u32 %s163, 1
          %s364 = scalar_lea.sflag [#allocation4], %s363
          %s365 = sand.u32 %s163, 1
          %s366 = smul.addr %s365, 4
          %s367 = scalar_lea.vmem [#allocation7], %s366
          %369 = dma.done %s364, 64
        $region60: #{tpu_custom_call.1} parent=55 // pred_fallthru
          _
      $region56: #{tpu_custom_call.1} parent=5 // pred_fallthru
        _
    $region6: #{tpu_custom_call.1} parent=1 // loop_footer
      %s22 = sadd.s32 1, %s18
    $region7: #{tpu_custom_call.1} parent=1 // loop_footer_branch
      %17 = sbr.rel target = $region3
    $region8: #{tpu_custom_call.1} parent=1 // loop_exit
      _
    %370 = vsyncpa [#allocation3], 1
    %s371 = scalar_lea.sflag [#allocation3], 1
    %372 = vsyncpa %s371, 1
    %373 = vsyncpa [#allocation6], 1
    %374 = vsyncpa [#allocation4], 1
    %s375 = scalar_lea.sflag [#allocation4], 1
    %376 = vsyncpa %s375, 1

</llo_original>
